<compile_context>
chip_gen: v7x
topology: tpu7x:2x2x1
jax: 0.10.0
libtpu: 0.0.40
codegen_flags: <defaults>
</compile_context>

<pallas_src>
import functools

import jax
import jax.numpy as jnp
from jax.experimental import pallas as pl
from jax.experimental.pallas import tpu as pltpu


def _round_up(x, m):
    return ((x + m - 1) // m) * m


def _vmem_capacity_bytes():
    try:
        info = pltpu.get_tpu_info()
        cap = getattr(info, "vmem_capacity_bytes", None)
        if cap:
            return int(cap)
    except Exception:
        pass
    return 128 * 1024 * 1024


# --------------------------------------------------------------------------
# Kernel 1: single class tile (tile_c == C).  One pass, no scratch.
# --------------------------------------------------------------------------
def _ce_kernel_single(logits_ref, labels_ref, alpha_ref, ones_ref, out_ref, *,
                      n_rows, mask_rows):
    i = pl.program_id(0)
    tile_m, tile_c = logits_ref.shape

    x = logits_ref[...].astype(jnp.float32)          # (TM, C) f32 compute
    labels = labels_ref[...]                          # (TM, 1) int32
    ones = ones_ref[...]                               # (C, 1)  f32

    # tile_c == full C here, so there are never padded columns -> no col mask.
    m = jnp.max(x, axis=1, keepdims=True)              # XLU reduction
    e = jnp.exp(x - m)                                  # VALU + EUP
    s = jnp.dot(e, ones, preferred_element_type=jnp.float32)        # MXU row-sum
    lse = m + jnp.log(s)                                # (TM, 1)

    col = jax.lax.broadcasted_iota(jnp.int32, (1, tile_c), 1)        # (1, C)
    picked = jnp.dot(jnp.where(col == labels, x, 0.0), ones,
                     preferred_element_type=jnp.float32)             # MXU gather-sum

    per_row = alpha_ref[...] * (lse - picked)           # (TM, 1)
    if mask_rows:
        row = jax.lax.broadcasted_iota(jnp.int32, (tile_m, 1), 0) + i * tile_m
        per_row = jnp.where(row < n_rows, per_row, 0.0)

    out_ref[...] = jnp.full((1, 1, 128), jnp.sum(per_row), dtype=jnp.float32)


# --------------------------------------------------------------------------
# Kernel 2: multiple class tiles.  Online logsumexp across the class axis.
# --------------------------------------------------------------------------
def _ce_kernel_multi(logits_ref, labels_ref, alpha_ref, ones_ref, out_ref,
                     m_scr, l_scr, p_scr, *, n_rows, n_cols, mask_rows, mask_last):
    i = pl.program_id(0)            # row-tile index   ("parallel")
    k = pl.program_id(1)            # class-tile index ("arbitrary", reduction, last)
    nk = pl.num_programs(1)
    tile_m, tile_c = logits_ref.shape

    @pl.when(k == 0)
    def _():
        m_scr[...] = jnp.full((tile_m, 1), -jnp.inf, dtype=jnp.float32)
        l_scr[...] = jnp.zeros((tile_m, 1), dtype=jnp.float32)
        p_scr[...] = jnp.zeros((tile_m, 1), dtype=jnp.float32)

    logits = logits_ref[...].astype(jnp.float32)        # (TM, TC) f32 compute
    labels = labels_ref[...]                             # (TM, 1)  int32
    ones = ones_ref[...]                                  # (TC, 1)  f32
    # (1, TC) iota + scalar offset; broadcasting happens inside the compares.
    col = jax.lax.broadcasted_iota(jnp.int32, (1, tile_c), 1) + k * tile_c

    def update(x):
        # x: (TM, TC) f32; any padded columns are pre-masked to -inf.
        m_prev = m_scr[...]
        m_new = jnp.maximum(m_prev, jnp.max(x, axis=1, keepdims=True))   # XLU
        e = jnp.exp(x - m_new)                                            # VALU + EUP
        s = jnp.dot(e, ones, preferred_element_type=jnp.float32)          # MXU row-sum
        l_scr[...] = l_scr[...] * jnp.exp(m_prev - m_new) + s
        m_scr[...] = m_new
        # Valid labels are always < n_cols, so padded columns can never match:
        # no column-validity mask needed for the gather.
        p_scr[...] += jnp.dot(jnp.where(col == labels, x, 0.0), ones,
                              preferred_element_type=jnp.float32)          # MXU

    if mask_last:
        # Ragged C: only the last class tile pays for the compare+select.
        @pl.when(k < nk - 1)
        def _():
            update(logits)

        @pl.when(k == nk - 1)
        def _():
            update(jnp.where(col < n_cols, logits, -jnp.inf))
    else:
        update(logits)

    @pl.when(k == nk - 1)
    def _():
        lse = m_scr[...] + jnp.log(l_scr[...])            # (TM, 1)
        per_row = alpha_ref[...] * (lse - p_scr[...])
        if mask_rows:
            row = jax.lax.broadcasted_iota(jnp.int32, (tile_m, 1), 0) + i * tile_m
            per_row = jnp.where(row < n_rows, per_row, 0.0)
        out_ref[...] = jnp.full((1, 1, 128), jnp.sum(per_row), dtype=jnp.float32)


# --------------------------------------------------------------------------
# Wrapper
# --------------------------------------------------------------------------
def cross_entropy_loss(logits, labels, class_weights, *,
                       tile_m=None, tile_c=None, vmem_limit_bytes=None):
    """logits: [M, C] (f32 or bf16), labels: [M] int, class_weights: [C]."""
    M, C = logits.shape
    labels2d = labels.reshape(M, 1).astype(jnp.int32)
    # alpha = weights[label] hoisted out of the hot loop (tiny M-element gather).
    alpha2d = class_weights.astype(jnp.float32)[labels].reshape(M, 1)

    vmem_cap = _vmem_capacity_bytes()
    small_vmem = vmem_cap < 100 * 1024 * 1024     # 64-MiB-VMEM (v7x-class) chips

    # ---- class tiling: full C by default (single-pass path), else 2048 ----
    if tile_c is None:
        tile_c = C if C <= 2048 else 2048
    if tile_c >= C:
        tile_c = C
    else:
        assert tile_c % 128 == 0, "tile_c must be a multiple of 128 when tiling C"
    n_col_tiles = pl.cdiv(C, tile_c)

    # ---- row tiling: dtype-aware sublane multiple + generation-aware budget ----
    itemsize = jnp.dtype(logits.dtype).itemsize
    sub = max(8, (8 * 4) // itemsize)             # f32:8, bf16:16, int8/fp8:32
    if tile_m is None:
        # f32-equivalent compute-tile budget (intermediates inside are f32).
        compute_budget = (2 if small_vmem else 4) * 1024 * 1024
        tm = max(sub, compute_budget // (tile_c * 4))
        if small_vmem and M > sub:
            # Keep >= 2 row tiles so both TensorCores get work on the
            # "parallel" row axis of 2-TC chips.
            tm = min(tm, _round_up(pl.cdiv(M, 2), sub))
        tm = max(sub, (tm // sub) * sub)
        tile_m = min(tm, _round_up(M, sub))
    else:
        tile_m = max(sub, _round_up(tile_m, sub))

    n_row_tiles = pl.cdiv(M, tile_m)
    mask_rows = (M % tile_m) != 0
    mask_last_cols = (C % tile_c) != 0

    if vmem_limit_bytes is None:
        # Cap on 64-MiB-VMEM chips; use the headroom on 128-MiB chips.
        vmem_limit_bytes = (40 if small_vmem else 64) * 1024 * 1024

    ones = jnp.ones((tile_c, 1), dtype=jnp.float32)   # MXU row-sum RHS

    cost = pl.CostEstimate(
        flops=5 * M * C,
        transcendentals=M * C,                        # one exp per logit
        bytes_accessed=(M * C * itemsize + M * 8
                        + tile_c * 4 + n_row_tiles * 128 * 4),
    )

    if n_col_tiles == 1:
        kernel = functools.partial(_ce_kernel_single, n_rows=M, mask_rows=mask_rows)
        grid_spec = pltpu.PrefetchScalarGridSpec(
            num_scalar_prefetch=0,
            grid=(n_row_tiles,),
            in_specs=[
                pl.BlockSpec((tile_m, tile_c), lambda i: (i, 0)),   # logits (native dtype)
                pl.BlockSpec((tile_m, 1), lambda i: (i, 0)),        # labels
                pl.BlockSpec((tile_m, 1), lambda i: (i, 0)),        # alpha = w[label]
                pl.BlockSpec((tile_c, 1), lambda i: (0, 0)),        # ones column
            ],
            out_specs=pl.BlockSpec((1, 1, 128), lambda i: (i, 0, 0)),
        )
        dim_sem = ("parallel",)
    else:
        kernel = functools.partial(_ce_kernel_multi, n_rows=M, n_cols=C,
                                   mask_rows=mask_rows, mask_last=mask_last_cols)
        grid_spec = pltpu.PrefetchScalarGridSpec(
            num_scalar_prefetch=0,
            grid=(n_row_tiles, n_col_tiles),
            in_specs=[
                pl.BlockSpec((tile_m, tile_c), lambda i, k: (i, k)),  # logits
                pl.BlockSpec((tile_m, 1), lambda i, k: (i, 0)),       # labels
                pl.BlockSpec((tile_m, 1), lambda i, k: (i, 0)),       # alpha
                pl.BlockSpec((tile_c, 1), lambda i, k: (0, 0)),       # ones column
            ],
            out_specs=pl.BlockSpec((1, 1, 128), lambda i, k: (i, 0, 0)),
            scratch_shapes=[
                pltpu.VMEM((tile_m, 1), jnp.float32),   # running max
                pltpu.VMEM((tile_m, 1), jnp.float32),   # running sum(exp)
                pltpu.VMEM((tile_m, 1), jnp.float32),   # picked logit
            ],
        )
        dim_sem = ("parallel", "arbitrary")

    partials = pl.pallas_call(
        kernel,
        out_shape=jax.ShapeDtypeStruct((n_row_tiles, 1, 128), jnp.float32),
        grid_spec=grid_spec,
        compiler_params=pltpu.CompilerParams(
            dimension_semantics=dim_sem,
            vmem_limit_bytes=vmem_limit_bytes,
        ),
        cost_estimate=cost,
    )(logits, labels2d, alpha2d, ones)

    # torch's loss.mean() over the (M, 1) per-row losses == sum / M.
    return jnp.sum(partials[:, 0, 0]) / M


def _reference(logits, labels, class_weights):
    logits = logits.astype(jnp.float32)
    m = jnp.max(logits, axis=1, keepdims=True)
    lse = m + jnp.log(jnp.sum(jnp.exp(logits - m), axis=1, keepdims=True))
    picked = jnp.take_along_axis(logits, labels.reshape(-1, 1), axis=1)
    alpha = class_weights.astype(jnp.float32)[labels].reshape(-1, 1)
    return jnp.mean(alpha * (lse - picked))


if __name__ == "__main__":
    key = jax.random.PRNGKey(0)
    k1, k2, k3, k4 = jax.random.split(key, 4)

    # --- case 1: small f32, single class tile (M predictions x C classes) ---
    M, C = 16, 32
    logits = jax.random.normal(k1, (M, C), dtype=jnp.float32)
    labels = jax.random.randint(k2, (M,), 0, C, dtype=jnp.int32)
    class_weights = jnp.linspace(0.5, 2.0, C, dtype=jnp.float32)

    loss = jax.block_until_ready(cross_entropy_loss(logits, labels, class_weights))
    ref = _reference(logits, labels, class_weights)
    assert jnp.allclose(loss, ref, rtol=1e-5, atol=1e-5), (loss, ref)

    # --- case 2: ragged M + forced class tiling (online logsumexp + last-tile mask) ---
    M2, C2 = 20, 300
    logits2 = jax.random.normal(k3, (M2, C2), dtype=jnp.float32)
    labels2 = jax.random.randint(k4, (M2,), 0, C2, dtype=jnp.int32)
    weights2 = jnp.linspace(0.25, 3.0, C2, dtype=jnp.float32)

    loss2 = jax.block_until_ready(
        cross_entropy_loss(logits2, labels2, weights2, tile_c=128))
    ref2 = _reference(logits2, labels2, weights2)
    assert jnp.allclose(loss2, ref2, rtol=1e-5, atol=1e-5), (loss2, ref2)

    # --- case 3: bf16 logits (native-dtype streaming, f32 compute inside) ---
    logits3 = logits.astype(jnp.bfloat16)
    loss3 = jax.block_until_ready(cross_entropy_loss(logits3, labels, class_weights))
    ref3 = _reference(logits3.astype(jnp.float32), labels, class_weights)
    assert jnp.allclose(loss3, ref3, rtol=1e-4, atol=1e-4), (loss3, ref3)

    print("KERNEL_OK")
</pallas_src>

<mosaic_0001>
module attributes {stable_mosaic.version = 11 : i64} {
  func.func @_ce_kernel_single(%arg0: i32, %arg1: memref<16x32xf32, #tpu.memory_space<vmem>>, %arg2: memref<16x1xi32, #tpu.memory_space<vmem>>, %arg3: memref<16x1xf32, #tpu.memory_space<vmem>>, %arg4: memref<32x1xf32, #tpu.memory_space<vmem>>, %arg5: memref<1x1x128xf32, #tpu.memory_space<vmem>>) attributes {dimension_semantics = [#tpu.dimension_semantics<parallel>], iteration_bounds = array<i64: 1>, scalar_prefetch = 0 : i64, scratch_operands = 0 : i64, tpu.core_type = #tpu.core_type<tc>, window_params = [{transform_indices = @transform_0, window_bounds = array<i64: 16, 32>}, {transform_indices = @transform_1, window_bounds = array<i64: 16, 1>}, {transform_indices = @transform_2, window_bounds = array<i64: 16, 1>}, {pipeline_mode = #tpu.pipeline_mode<synchronous>, transform_indices = @transform_3, window_bounds = array<i64: 32, 1>}, {transform_indices = @transform_4, window_bounds = array<i64: 1, 1, 128>}]} {
    %c0 = arith.constant 0 : index
    %c0_0 = arith.constant 0 : index
    %0 = vector.load %arg1[%c0, %c0_0] : memref<16x32xf32, #tpu.memory_space<vmem>>, vector<16x32xf32>
    %c0_1 = arith.constant 0 : index
    %c0_2 = arith.constant 0 : index
    %1 = vector.load %arg2[%c0_1, %c0_2] : memref<16x1xi32, #tpu.memory_space<vmem>>, vector<16x1xi32>
    %c0_3 = arith.constant 0 : index
    %c0_4 = arith.constant 0 : index
    %2 = vector.load %arg4[%c0_3, %c0_4] : memref<32x1xf32, #tpu.memory_space<vmem>>, vector<32x1xf32>
    %cst = arith.constant dense<0xFF800000> : vector<16xf32>
    %3 = vector.multi_reduction <maximumf>, %0, %cst [1] : vector<16x32xf32> to vector<16xf32>
    %4 = vector.shape_cast %3 : vector<16xf32> to vector<16x1xf32>
    %5 = vector.broadcast %4 : vector<16x1xf32> to vector<16x32xf32>
    %6 = arith.subf %0, %5 : vector<16x32xf32>
    %7 = math.exp %6 : vector<16x32xf32>
    %cst_5 = arith.constant dense<0.000000e+00> : vector<16x1xf32>
    %8 = tpu.matmul %7, %2, %cst_5 {dimension_numbers = #tpu.dot_dimension_numbers<[1], [0], [0], [1], [0, 0, 1, 1], [], []>} : vector<16x32xf32>, vector<32x1xf32>, vector<16x1xf32> -> vector<16x1xf32>
    %9 = math.log %8 : vector<16x1xf32>
    %10 = arith.addf %4, %9 : vector<16x1xf32>
    %11 = tpu.iota {dimensions = array<i32: 1>} : vector<1x32xi32>
    %12 = vector.broadcast %11 : vector<1x32xi32> to vector<16x32xi32>
    %13 = vector.broadcast %1 : vector<16x1xi32> to vector<16x32xi32>
    %14 = arith.cmpi eq, %12, %13 : vector<16x32xi32>
    %cst_6 = arith.constant 0.000000e+00 : f32
    %15 = vector.broadcast %cst_6 : f32 to vector<16x32xf32>
    %16 = arith.select %14, %0, %15 : vector<16x32xi1>, vector<16x32xf32>
    %cst_7 = arith.constant dense<0.000000e+00> : vector<16x1xf32>
    %17 = tpu.matmul %16, %2, %cst_7 {dimension_numbers = #tpu.dot_dimension_numbers<[1], [0], [0], [1], [0, 0, 1, 1], [], []>} : vector<16x32xf32>, vector<32x1xf32>, vector<16x1xf32> -> vector<16x1xf32>
    %c0_8 = arith.constant 0 : index
    %c0_9 = arith.constant 0 : index
    %18 = vector.load %arg3[%c0_8, %c0_9] : memref<16x1xf32, #tpu.memory_space<vmem>>, vector<16x1xf32>
    %19 = arith.subf %10, %17 : vector<16x1xf32>
    %20 = arith.mulf %18, %19 : vector<16x1xf32>
    %21 = vector.shape_cast %20 : vector<16x1xf32> to vector<1x16x1xf32>
    %cst_10 = arith.constant dense<0.000000e+00> : vector<1xf32>
    %22 = vector.multi_reduction <add>, %21, %cst_10 [1, 2] : vector<1x16x1xf32> to vector<1xf32>
    %23 = vector.shape_cast %22 : vector<1xf32> to vector<1x1x1xf32>
    %24 = vector.extract %23[0, 0, 0] : f32 from vector<1x1x1xf32>
    %25 = vector.broadcast %24 : f32 to vector<1x1x128xf32>
    %c0_11 = arith.constant 0 : index
    %c0_12 = arith.constant 0 : index
    %c0_13 = arith.constant 0 : index
    %26 = vector.load %arg5[%c0_11, %c0_12, %c0_13] : memref<1x1x128xf32, #tpu.memory_space<vmem>>, vector<1x1x128xf32>
    tpu.vector_store %arg5[%c0_11, %c0_12, %c0_13], %25 {strides = array<i32>} : memref<1x1x128xf32, #tpu.memory_space<vmem>>, vector<1x1x128xf32>,
    return
  }
  func.func @transform_0(%arg0: i32) -> (i32, i32) {
    %c0_i32 = arith.constant 0 : i32
    %c0_i32_0 = arith.constant 0 : i32
    return %arg0, %c0_i32 : i32, i32
  }
  func.func @transform_1(%arg0: i32) -> (i32, i32) {
    %c0_i32 = arith.constant 0 : i32
    %c0_i32_0 = arith.constant 0 : i32
    return %arg0, %c0_i32 : i32, i32
  }
  func.func @transform_2(%arg0: i32) -> (i32, i32) {
    %c0_i32 = arith.constant 0 : i32
    %c0_i32_0 = arith.constant 0 : i32
    return %arg0, %c0_i32 : i32, i32
  }
  func.func @transform_3(%arg0: i32) -> (i32, i32) {
    %c0_i32 = arith.constant 0 : i32
    %c0_i32_0 = arith.constant 0 : i32
    %c0_i32_1 = arith.constant 0 : i32
    return %c0_i32, %c0_i32_0 : i32, i32
  }
  func.func @transform_4(%arg0: i32) -> (i32, i32, i32) {
    %c0_i32 = arith.constant 0 : i32
    %c0_i32_0 = arith.constant 0 : i32
    %c0_i32_1 = arith.constant 0 : i32
    return %arg0, %c0_i32, %c0_i32_0 : i32, i32, i32
  }
}

</mosaic_0001>

<llo_original>
// kernel: tpu_custom_call.1
$region0: #{tpu_custom_call.1}
  #allocation0 [shape = 'u32[]', space=smem, size = 0x4, offset = 0x4, fixed_abs, tag = 'smem constant byte address 0x4 - core index']
  #allocation1 [shape = 'u32[144,128]{1,0:T(1,128)}', space=vmem, size = 0x12000, scoped, tag = 'internal scratch']
  %s0 = inlined_call_operand.hbm [shape: f32[16,32], index: 0, kind: input, shape index: {}]
  %s1 = inlined_call_operand.hbm [shape: s32[16,1], index: 1, kind: input, shape index: {}]
  %s2 = inlined_call_operand.hbm [shape: f32[16,1], index: 2, kind: input, shape index: {}]
  %s3 = inlined_call_operand.hbm [shape: f32[32,1], index: 3, kind: input, shape index: {}]
  %s4 = inlined_call_operand.hbm [shape: f32[1,1,128], index: 4, kind: output, shape index: {}]
  %s5 = sld [smem:[#allocation0]]
  $region42: #{tpu_custom_call.1} parent=0
    _
  %s7 = ssub.s32 1, %s5
  %s8 = scalar_select 0, %s7, %s5
  $region1: #{tpu_custom_call.1} parent=0
    #allocation2 [shape = 'u8[8192]{0}', space=vmem, size = 0x2000, scoped, tag = 'input window, operand 0, single buffered']
    #allocation3 [shape = 's32[1]{0}', space=sflag, size = 0x4, scoped, tag = 'scoped memory for tpu_custom_call.1']
    #allocation4 [shape = 's32[1]{0}', space=sflag, size = 0x4, scoped, tag = 'scoped memory for tpu_custom_call.1']
    #allocation5 [shape = 'u8[8192]{0}', space=vmem, size = 0x2000, scoped, tag = 'input window, operand 1, single buffered']
    #allocation6 [shape = 's32[1]{0}', space=sflag, size = 0x4, scoped, tag = 'scoped memory for tpu_custom_call.1']
    #allocation7 [shape = 'u8[8192]{0}', space=vmem, size = 0x2000, scoped, tag = 'input window, operand 2, single buffered']
    #allocation8 [shape = 'u8[16384]{0}', space=vmem, size = 0x4000, scoped, tag = 'input window, operand 3, single buffered']
    #allocation9 [shape = 's32[1]{0}', space=sflag, size = 0x4, scoped, tag = 'scoped memory for tpu_custom_call.1']
    #allocation10 [shape = 'u8[512]{0}', space=vmem, size = 0x400, scoped, tag = 'output window, operand 0, single buffered']
    %9 = vsyncpa [#allocation3], 0
    %10 = vsyncpa [#allocation6], 0
    %11 = vsyncpa [#allocation9], 0
    %12 = vsyncpa [#allocation4], 0
    // Predicated region
    $region2: #{tpu_custom_call.1} parent=1 // pred_check
      _
    $region3: #{tpu_custom_call.1} parent=1 // pred_check_branch
      %14 = sbr.rel (0) target = $region5
    $region4: #{tpu_custom_call.1} parent=1 // pred_region
      %s16 = ssub.s32 256, 256
      %17 = vsyncadd [#allocation3], %s16
      %s18 = sshll.u32 [#allocation2], 4
      %s19 = int_to_ptr.vmem [resolvable:$true] %s18
      %24 = dma.hbm_to_vmem [thread:$0]  %s0, 256, %s19, [#allocation3], 128, 128, 8
    $region5: #{tpu_custom_call.1} parent=1 // pred_fallthru
      _
    // Predicated region
    $region6: #{tpu_custom_call.1} parent=1 // pred_check
      _
    $region7: #{tpu_custom_call.1} parent=1 // pred_check_branch
      %26 = sbr.rel (0) target = $region9
    $region8: #{tpu_custom_call.1} parent=1 // pred_region
      %s28 = ssub.s32 256, 256
      %29 = vsyncadd [#allocation6], %s28
      %s30 = sshll.u32 [#allocation5], 4
      %s31 = int_to_ptr.vmem [resolvable:$true] %s30
      %36 = dma.hbm_to_vmem [thread:$0]  %s1, 256, %s31, [#allocation6], 128, 128, 8
    $region9: #{tpu_custom_call.1} parent=1 // pred_fallthru
      _
    // Predicated region
    $region10: #{tpu_custom_call.1} parent=1 // pred_check
      _
    $region11: #{tpu_custom_call.1} parent=1 // pred_check_branch
      %38 = sbr.rel (0) target = $region13
    $region12: #{tpu_custom_call.1} parent=1 // pred_region
      %s40 = ssub.s32 256, 256
      %41 = vsyncadd [#allocation6], %s40
      %s42 = sshll.u32 [#allocation7], 4
      %s43 = int_to_ptr.vmem [resolvable:$true] %s42
      %48 = dma.hbm_to_vmem [thread:$0]  %s2, 256, %s43, [#allocation6], 128, 128, 8
    $region13: #{tpu_custom_call.1} parent=1 // pred_fallthru
      _
    // Predicated region
    $region14: #{tpu_custom_call.1} parent=1 // pred_check
      _
    $region15: #{tpu_custom_call.1} parent=1 // pred_check_branch
      %50 = sbr.rel (0) target = $region17
    $region16: #{tpu_custom_call.1} parent=1 // pred_region
      %s52 = ssub.s32 512, 512
      %53 = vsyncadd [#allocation9], %s52
      %s54 = sshll.u32 [#allocation8], 4
      %s55 = int_to_ptr.vmem [resolvable:$true] %s54
      %60 = dma.hbm_to_vmem [thread:$0]  %s3, 512, %s55, [#allocation9], 128, 128, 8
    $region17: #{tpu_custom_call.1} parent=1 // pred_fallthru
      _
    // Predicated region
    $region18: #{tpu_custom_call.1} parent=1 // pred_check
      _
    $region19: #{tpu_custom_call.1} parent=1 // pred_check_branch
      %62 = sbr.rel (0) target = $region21
    $region20: #{tpu_custom_call.1} parent=1 // pred_region
      %63 = dma.done [#allocation3], 256
    $region21: #{tpu_custom_call.1} parent=1 // pred_fallthru
      _
    // Predicated region
    $region22: #{tpu_custom_call.1} parent=1 // pred_check
      _
    $region23: #{tpu_custom_call.1} parent=1 // pred_check_branch
      %65 = sbr.rel (0) target = $region25
    $region24: #{tpu_custom_call.1} parent=1 // pred_region
      %66 = dma.done [#allocation6], 256
    $region25: #{tpu_custom_call.1} parent=1 // pred_fallthru
      _
    // Predicated region
    $region26: #{tpu_custom_call.1} parent=1 // pred_check
      _
    $region27: #{tpu_custom_call.1} parent=1 // pred_check_branch
      %68 = sbr.rel (0) target = $region29
    $region28: #{tpu_custom_call.1} parent=1 // pred_region
      %69 = dma.done [#allocation6], 256
    $region29: #{tpu_custom_call.1} parent=1 // pred_fallthru
      _
    // Predicated region
    $region30: #{tpu_custom_call.1} parent=1 // pred_check
      _
    $region31: #{tpu_custom_call.1} parent=1 // pred_check_branch
      %71 = sbr.rel (0) target = $region33
    $region32: #{tpu_custom_call.1} parent=1 // pred_region
      %72 = dma.done [#allocation9], 512
    $region33: #{tpu_custom_call.1} parent=1 // pred_fallthru
      _
    %v73 = vld [vmem:[#allocation2] sm:$0xff]
    %v74 = vld [vmem:[#allocation2 + $0x8] sm:$0xff]
    %v75 = vld [vmem:[#allocation5] sm:$0xff]
    %v76 = vld [vmem:[#allocation5 + $0x8] sm:$0xff]
    %v77 = vld [vmem:[#allocation8] sm:$0xff]
    %v78 = vld [vmem:[#allocation8 + $0x8] sm:$0xff]
    %v79 = vld [vmem:[#allocation8 + $0x10] sm:$0xff]
    %v80 = vld [vmem:[#allocation8 + $0x18] sm:$0xff]
    %vm81 = vcmask 261120
    %v82 = vsel %vm81, %v73, -inf
    %83 = vmax.xlane.f32.xlu0 %v82
    %v84 = vpop.xlane.xlu0 %83
    %v85 = vsel %vm81, %v74, -inf
    %86 = vmax.xlane.f32.xlu0 %v85
    %v87 = vpop.xlane.xlu0 %86
    %v88 = vsub.f32 %v73, %v84
    %v89 = vsub.f32 %v74, %v87
    %v90 = vmul.f32 %v88, 1.442695
    %v91 = vpow.pop %v90
    %v92 = vmul.f32 %v89, 1.442695
    %v93 = vpow.pop %v92
    %v95 = vsel %vm81, %v91, 0
    %v98 = vsel %vm81, %v93, 0
    %100 = vmatprep.subr.mxu0 0.0
    %101 = vmatpush1.msra.mxu0 %v77
    %102 = vmatprep.subr.mxu0 0.0
    %103 = vmatpush1.msra.mxu0 %v78
    %104 = vmatprep.subr.mxu0 0.0
    %105 = vmatpush1.msra.mxu0 %v79
    %106 = vmatprep.subr.mxu0 0.0
    %107 = vmatpush1.msra.mxu0 %v80
    %108 = vmatprep.subr.mxu0 0.0
    %109 = vmatpush1.msra.mxu0 0.0
    %110 = vmatprep.subr.mxu0 0.0
    %111 = vmatpush1.msra.mxu0 0.0
    %112 = vmatprep.subr.mxu0 0.0
    %113 = vmatpush1.msra.mxu0 0.0
    %114 = vmatprep.subr.mxu0 0.0
    %115 = vmatpush1.msra.mxu0 0.0
    %116 = vmatprep.subr.mxu0 0.0
    %117 = vmatpush1.msra.mxu0 0.0
    %118 = vmatprep.subr.mxu0 0.0
    %119 = vmatpush1.msra.mxu0 0.0
    %120 = vmatprep.subr.mxu0 0.0
    %121 = vmatpush1.msra.mxu0 0.0
    %122 = vmatprep.subr.mxu0 0.0
    %123 = vmatpush1.msra.mxu0 0.0
    %124 = vmatprep.subr.mxu0 0.0
    %125 = vmatpush1.msra.mxu0 0.0
    %126 = vmatprep.subr.mxu0 0.0
    %127 = vmatpush1.msra.mxu0 0.0
    %128 = vmatprep.subr.mxu0 0.0
    %129 = vmatpush1.msra.mxu0 0.0
    %130 = vmatprep.subr.mxu0 0.0
    %131 = vmatpush1.msra.mxu0 0.0
    %132 = vmatprep.subr.mxu0 0.0
    %133 = vmatpush1.msra.mxu0 0.0
    %134 = vmatprep.subr.mxu0 0.0
    %135 = vmatpush1.msra.mxu0 0.0
    %136 = vmatprep.subr.mxu0 0.0
    %137 = vmatpush1.msra.mxu0 0.0
    %138 = vmatprep.subr.mxu0 0.0
    %139 = vmatpush1.msra.mxu0 0.0
    %140 = vmatprep.subr.mxu0 0.0
    %141 = vmatpush1.msra.mxu0 0.0
    %142 = vmatprep.subr.mxu0 0.0
    %143 = vmatpush1.msra.mxu0 0.0
    %144 = vmatprep.subr.mxu0 0.0
    %145 = vmatpush1.msra.mxu0 0.0
    %146 = vmatprep.subr.mxu0 0.0
    %147 = vmatpush1.msra.mxu0 0.0
    %148 = vmatprep.subr.mxu0 0.0
    %149 = vmatpush1.msra.mxu0 0.0
    %150 = vmatprep.subr.mxu0 0.0
    %151 = vmatpush1.msra.mxu0 0.0
    %152 = vmatprep.subr.mxu0 0.0
    %153 = vmatpush1.msra.mxu0 0.0
    %154 = vmatprep.subr.mxu0 0.0
    %155 = vmatpush1.msra.mxu0 0.0
    %156 = vmatprep.subr.mxu0 0.0
    %157 = vmatpush1.msra.mxu0 0.0
    %158 = vmatprep.subr.mxu0 0.0
    %159 = vmatpush1.msra.mxu0 0.0
    %160 = vmatprep.subr.mxu0 0.0
    %161 = vmatpush1.msra.mxu0 0.0
    %162 = vmatprep.subr.mxu0 0.0
    %163 = vmatpush1.msra.mxu0 0.0
    %164 = vmatprep.mubr.f32.mxu0 0.0
    %165 = vmatmul.mubr.f32.gmra.mrb[0].mxu0 %v95
    %v166 = vpop.f32.mrb[0].mxu0
    %v167 = vadd.f32 0.0, %v166
    %v168 = vpop.f32.mrb[0].mxu0
    %169 = vmatprep.mubr.f32.mxu0 0.0
    %170 = vmatmul.mubr.f32.gmra.mrb[0].mxu0 %v98
    %v171 = vpop.f32.mrb[0].mxu0
    %v172 = vadd.f32 0.0, %v171
    %v173 = vpop.f32.mrb[0].mxu0
    %174 = vdwg.mxu0
    %v175 = vlog2.pop %v167
    %v176 = vmul.f32 %v175, 0.6931472
    %v177 = vlog2.pop %v172
    %v178 = vmul.f32 %v177, 0.6931472
    %v179 = vadd.f32 %v84, %v176
    %v180 = vadd.f32 %v87, %v178
    %v181 = vlaneseq
    %v182 = vand.u32 %v181, 127
    %183 = vset.pattern.permute.xlu0 0
    %184 = vperm.xlu0 %183, %v75
    %v185 = vpop.permute.xlu0 %184
    %186 = vset.pattern.permute.xlu0 0
    %187 = vperm.xlu0 %186, %v76
    %v188 = vpop.permute.xlu0 %187
    %vm189 = vcmp.eq.s32.totalorder %v182, %v185
    %vm190 = vcmp.eq.s32.totalorder %v182, %v188
    %v191 = vsel %vm189, %v73, 0.0
    %v192 = vsel %vm190, %v74, 0.0
    %v194 = vsel %vm81, %v191, 0
    %v197 = vsel %vm81, %v192, 0
    %199 = vmatprep.subr.mxu0 0.0
    %200 = vmatpush1.msra.mxu0 %v77
    %201 = vmatprep.subr.mxu0 0.0
    %202 = vmatpush1.msra.mxu0 %v78
    %203 = vmatprep.subr.mxu0 0.0
    %204 = vmatpush1.msra.mxu0 %v79
    %205 = vmatprep.subr.mxu0 0.0
    %206 = vmatpush1.msra.mxu0 %v80
    %207 = vmatprep.subr.mxu0 0.0
    %208 = vmatpush1.msra.mxu0 0.0
    %209 = vmatprep.subr.mxu0 0.0
    %210 = vmatpush1.msra.mxu0 0.0
    %211 = vmatprep.subr.mxu0 0.0
    %212 = vmatpush1.msra.mxu0 0.0
    %213 = vmatprep.subr.mxu0 0.0
    %214 = vmatpush1.msra.mxu0 0.0
    %215 = vmatprep.subr.mxu0 0.0
    %216 = vmatpush1.msra.mxu0 0.0
    %217 = vmatprep.subr.mxu0 0.0
    %218 = vmatpush1.msra.mxu0 0.0
    %219 = vmatprep.subr.mxu0 0.0
    %220 = vmatpush1.msra.mxu0 0.0
    %221 = vmatprep.subr.mxu0 0.0
    %222 = vmatpush1.msra.mxu0 0.0
    %223 = vmatprep.subr.mxu0 0.0
    %224 = vmatpush1.msra.mxu0 0.0
    %225 = vmatprep.subr.mxu0 0.0
    %226 = vmatpush1.msra.mxu0 0.0
    %227 = vmatprep.subr.mxu0 0.0
    %228 = vmatpush1.msra.mxu0 0.0
    %229 = vmatprep.subr.mxu0 0.0
    %230 = vmatpush1.msra.mxu0 0.0
    %231 = vmatprep.subr.mxu0 0.0
    %232 = vmatpush1.msra.mxu0 0.0
    %233 = vmatprep.subr.mxu0 0.0
    %234 = vmatpush1.msra.mxu0 0.0
    %235 = vmatprep.subr.mxu0 0.0
    %236 = vmatpush1.msra.mxu0 0.0
    %237 = vmatprep.subr.mxu0 0.0
    %238 = vmatpush1.msra.mxu0 0.0
    %239 = vmatprep.subr.mxu0 0.0
    %240 = vmatpush1.msra.mxu0 0.0
    %241 = vmatprep.subr.mxu0 0.0
    %242 = vmatpush1.msra.mxu0 0.0
    %243 = vmatprep.subr.mxu0 0.0
    %244 = vmatpush1.msra.mxu0 0.0
    %245 = vmatprep.subr.mxu0 0.0
    %246 = vmatpush1.msra.mxu0 0.0
    %247 = vmatprep.subr.mxu0 0.0
    %248 = vmatpush1.msra.mxu0 0.0
    %249 = vmatprep.subr.mxu0 0.0
    %250 = vmatpush1.msra.mxu0 0.0
    %251 = vmatprep.subr.mxu0 0.0
    %252 = vmatpush1.msra.mxu0 0.0
    %253 = vmatprep.subr.mxu0 0.0
    %254 = vmatpush1.msra.mxu0 0.0
    %255 = vmatprep.subr.mxu0 0.0
    %256 = vmatpush1.msra.mxu0 0.0
    %257 = vmatprep.subr.mxu0 0.0
    %258 = vmatpush1.msra.mxu0 0.0
    %259 = vmatprep.subr.mxu0 0.0
    %260 = vmatpush1.msra.mxu0 0.0
    %261 = vmatprep.subr.mxu0 0.0
    %262 = vmatpush1.msra.mxu0 0.0
    %263 = vmatprep.mubr.f32.mxu0 0.0
    %264 = vmatmul.mubr.f32.gmra.mrb[0].mxu0 %v194
    %v265 = vpop.f32.mrb[0].mxu0
    %v266 = vadd.f32 0.0, %v265
    %v267 = vpop.f32.mrb[0].mxu0
    %268 = vmatprep.mubr.f32.mxu0 0.0
    %269 = vmatmul.mubr.f32.gmra.mrb[0].mxu0 %v197
    %v270 = vpop.f32.mrb[0].mxu0
    %v271 = vadd.f32 0.0, %v270
    %v272 = vpop.f32.mrb[0].mxu0
    %273 = vdwg.mxu0
    %v274 = vld [vmem:[#allocation7] sm:$0xff]
    %v275 = vld [vmem:[#allocation7 + $0x8] sm:$0xff]
    %v276 = vsub.f32 %v179, %v266
    %v277 = vsub.f32 %v180, %v271
    %v278 = vmul.f32 %v274, %v276
    %v279 = vmul.f32 %v275, %v277
    %vm280 = vcmask 7168
    %v281 = vsel %vm280, %v278, 0.0
    %v282 = vsel %vm280, %v279, 0.0
    %v283 = vadd.f32 %v281, %v282
    %284 = vadd.xlane.f32.xlu0 %v283
    %v285 = vpop.xlane.xlu0 %284
    %v286 = vrot.slane %v285, 4
    %v287 = vadd.f32 %v285, %v286
    %v288 = vrot.slane %v287, 2
    %v289 = vadd.f32 %v287, %v288
    %v290 = vrot.slane %v289, 1
    %v291 = vadd.f32 %v289, %v290
    %s292 = vtos %v291
    %v293 = vstv %s292
    %294 = vst [vmem:[#allocation10] sm:$0x1] %v293
    // Predicated region
    $region34: #{tpu_custom_call.1} parent=1 // pred_check
      _
    $region35: #{tpu_custom_call.1} parent=1 // pred_check_branch
      %296 = sbr.rel (0) target = $region37
    $region36: #{tpu_custom_call.1} parent=1 // pred_region
      %s298 = ssub.s32 16, 16
      %299 = vsyncadd [#allocation4], %s298
      %s301 = sshll.u32 [#allocation10], 4
      %s302 = int_to_ptr.vmem [resolvable:$true] %s301
      %304 = dma.vmem_to_hbm [thread:$0]  %s302, 16, %s4, [#allocation4]
    $region37: #{tpu_custom_call.1} parent=1 // pred_fallthru
      _
    // Predicated region
    $region38: #{tpu_custom_call.1} parent=1 // pred_check
      _
    $region39: #{tpu_custom_call.1} parent=1 // pred_check_branch
      %306 = sbr.rel (0) target = $region41
    $region40: #{tpu_custom_call.1} parent=1 // pred_region
      %307 = dma.done [#allocation4], 16
    $region41: #{tpu_custom_call.1} parent=1 // pred_fallthru
      _
    %308 = vsyncpa [#allocation3], 1
    %309 = vsyncpa [#allocation6], 1
    %310 = vsyncpa [#allocation9], 1
    %311 = vsyncpa [#allocation4], 1

</llo_original>
